<compile_context>
chip_gen: v6e
topology: v6e:2x2x1
jax: 0.10.0
libtpu: 0.0.40
codegen_flags: <defaults>
</compile_context>

<pallas_src>
import functools

import jax
import jax.numpy as jnp
from jax.experimental import pallas as pl
from jax.experimental.pallas import tpu as pltpu


def _round_up(x, m):
    return (x + m - 1) // m * m


def _vmem_limit_bytes():
    """Per-generation scoped-VMEM limit with headroom for Mosaic scratch."""
    cap = 64 * 1024 * 1024  # conservative fallback (v7x physical VMEM per TC)
    try:
        info = pltpu.get_tpu_info()
        c = getattr(info, "vmem_capacity_bytes", None)
        if c:
            cap = int(c)
    except Exception:
        pass
    return int(cap * 0.85)   # ~54 MiB on v7x, ~108 MiB on v5e/v6e


def _pick_block(rows, hw, itemsize, n_arrays, budget):
    """Block sizes for a streaming pass over a (rows, hw) array.

    n_arrays = number of arrays streamed per step (double-buffered each).
    """
    tile_hw = min(2048, _round_up(hw, 128))
    if tile_hw >= hw:
        tile_hw = hw                      # full dim is always a legal block
    bytes_per_row = n_arrays * 2 * tile_hw * itemsize
    max_rows = max(1, budget // bytes_per_row)
    target_rows = max(1, (2 * 1024 * 1024) // (tile_hw * itemsize))  # ~2 MiB/array
    br = min(max_rows, target_rows, rows)
    if br >= rows:
        return rows, tile_hw
    return max(8, br // 8 * 8), tile_hw


# ---------------------------------------------------------------------------
# Shared gate math: fc1 -> BatchNorm1d(train) -> ReLU -> fc2 -> sigmoid.
# ---------------------------------------------------------------------------
def _gate_math(pooled, w1, b1, gamma, beta, w2, b2):
    zc = jnp.dot(pooled, w1, preferred_element_type=jnp.float32) + b1
    # BatchNorm1d in training mode: biased batch statistics, eps = 1e-5.
    # TODO(synk): running_mean / running_var are not tracked (pure forward).
    mu = jnp.mean(zc, axis=0, keepdims=True)
    var = jnp.mean((zc - mu) * (zc - mu), axis=0, keepdims=True)
    zc = (zc - mu) * jax.lax.rsqrt(var + 1e-5)
    zc = zc * gamma + beta
    zc = jnp.maximum(zc, 0.0)
    z = jnp.dot(zc, w2, preferred_element_type=jnp.float32) + b2
    return jax.nn.sigmoid(z)


# ---------------------------------------------------------------------------
# Fully-fused fast path: x1/x2 resident in VMEM; pool + gate + blend.
# ---------------------------------------------------------------------------
def _fused_kernel(x1_ref, x2_ref, w1_ref, b1_ref, g_ref, be_ref, w2_ref,
                  b2_ref, out_ref, *, inv_hw):
    x1 = x1_ref[...]                                           # (N, C, HW)
    x2 = x2_ref[...]
    s = x1.astype(jnp.float32) + x2.astype(jnp.float32)
    pooled = jnp.sum(s, axis=-1) * inv_hw                      # (N, C) f32
    gate = _gate_math(pooled, w1_ref[...], b1_ref[...], g_ref[...],
                      be_ref[...], w2_ref[...], b2_ref[...])   # (N, C) f32
    beta = gate[..., None].astype(x1.dtype)                    # (N, C, 1)
    out_ref[...] = (x2 + beta * (x1 - x2)).astype(out_ref.dtype)


# ---------------------------------------------------------------------------
# Pass 1 (streaming path): spatial sums of x1+x2, rows = N*C flattened.
# ---------------------------------------------------------------------------
def _pool_kernel(x1_ref, x2_ref, sum_ref, acc_ref, *, hw, tile_hw, ragged):
    t = pl.program_id(1)

    @pl.when(t == 0)
    def _():
        acc_ref[...] = jnp.zeros_like(acc_ref)

    # VPU add first, then a single cross-lane reduce per tile.
    s = x1_ref[...].astype(jnp.float32) + x2_ref[...].astype(jnp.float32)
    if ragged:
        col = jax.lax.broadcasted_iota(jnp.int32, s.shape, 1) + t * tile_hw
        s = jnp.where(col < hw, s, 0.0)       # mask OOB tail columns
    acc_ref[...] += jnp.sum(s, axis=-1, keepdims=True)

    @pl.when(t == pl.num_programs(1) - 1)
    def _():
        sum_ref[...] = acc_ref[...]


# ---------------------------------------------------------------------------
# Pass 2 (streaming path): tiny gate over the whole batch (BN couples N).
# ---------------------------------------------------------------------------
def _gate_kernel(sum_ref, w1_ref, b1_ref, g_ref, be_ref, w2_ref, b2_ref,
                 gate_ref, *, inv_hw):
    pooled = sum_ref[...] * inv_hw                             # (N, C) f32
    gate_ref[...] = _gate_math(pooled, w1_ref[...], b1_ref[...], g_ref[...],
                               be_ref[...], w2_ref[...], b2_ref[...])


# ---------------------------------------------------------------------------
# Pass 3 (streaming path): gated blend out = x2 + beta * (x1 - x2).
# ---------------------------------------------------------------------------
def _blend_kernel(gate_ref, x1_ref, x2_ref, out_ref):
    beta = gate_ref[...].astype(x1_ref.dtype)                  # (br, 1)
    x1 = x1_ref[...]                                           # (br, thw)
    x2 = x2_ref[...]
    out_ref[...] = (x2 + beta * (x1 - x2)).astype(out_ref.dtype)


# ---------------------------------------------------------------------------
# Wrapper
# ---------------------------------------------------------------------------
def cs_forward(x1, x2, params, *, force_multipass=False):
    """x1, x2: (N, C, H, W). params: dict of fc1/fc2/bn weights."""
    N, C, H, W = x1.shape
    HW = H * W
    R = N * C
    itemsize = jnp.dtype(x1.dtype).itemsize
    vmem_limit = _vmem_limit_bytes()
    inv_hw = 1.0 / float(HW)

    # PyTorch Linear stores W as (out, in); kernels consume (in, out).
    w1 = params["fc1_w"].T                        # (C, C//2)
    b1 = params["fc1_b"].reshape(1, -1)           # (1, C//2)
    bn_g = params["bn_gamma"].reshape(1, -1)      # (1, C//2)
    bn_b = params["bn_beta"].reshape(1, -1)       # (1, C//2)
    w2 = params["fc2_w"].T                        # (C//2, C)
    b2 = params["fc2_b"].reshape(1, -1)           # (1, C)

    vmem = pl.BlockSpec(memory_space=pltpu.VMEM)

    # ---- Small-activation fast path: everything resident in VMEM, one call.
    padded_elems = N * _round_up(C, 8) * _round_up(HW, 128)
    fused_bytes = padded_elems * (3 * itemsize + 16)  # in/out + f32 temps (conservative)
    if (not force_multipass) and fused_bytes <= vmem_limit // 2:
        out = pl.pallas_call(
            functools.partial(_fused_kernel, inv_hw=inv_hw),
            out_shape=jax.ShapeDtypeStruct((N, C, HW), x1.dtype),
            in_specs=[vmem] * 8,
            out_specs=vmem,
            compiler_params=pltpu.CompilerParams(vmem_limit_bytes=vmem_limit),
        )(x1.reshape(N, C, HW), x2.reshape(N, C, HW),
          w1, b1, bn_g, bn_b, w2, b2)
        return out.reshape(N, C, H, W)

    # ---- Streaming path over rows = N*C flattened; no padding / slicing.
    x1r = x1.reshape(R, HW)
    x2r = x2.reshape(R, HW)
    budget = int(vmem_limit * 0.6)

    # Pass 1: pooled spatial sums of x1+x2 (never materialized in HBM).
    br_p, thw_p = _pick_block(R, HW, itemsize, n_arrays=2, budget=budget)
    ragged_p = (HW % thw_p) != 0
    sums = pl.pallas_call(
        functools.partial(_pool_kernel, hw=HW, tile_hw=thw_p, ragged=ragged_p),
        out_shape=jax.ShapeDtypeStruct((R, 1), jnp.float32),
        grid=(pl.cdiv(R, br_p), pl.cdiv(HW, thw_p)),
        in_specs=[pl.BlockSpec((br_p, thw_p), lambda r, t: (r, t)),
                  pl.BlockSpec((br_p, thw_p), lambda r, t: (r, t))],
        out_specs=pl.BlockSpec((br_p, 1), lambda r, t: (r, 0)),
        scratch_shapes=[pltpu.VMEM((br_p, 1), jnp.float32)],
        compiler_params=pltpu.CompilerParams(
            dimension_semantics=("parallel", "arbitrary"),
            vmem_limit_bytes=vmem_limit),
    )(x1r, x2r)

    # Pass 2: tiny gate (BatchNorm couples the whole batch).
    gate = pl.pallas_call(
        functools.partial(_gate_kernel, inv_hw=inv_hw),
        out_shape=jax.ShapeDtypeStruct((N, C), jnp.float32),
        in_specs=[vmem] * 7,
        out_specs=vmem,
    )(sums.reshape(N, C), w1, b1, bn_g, bn_b, w2, b2)

    # Pass 3: gated blend, both grid axes parallel; OOB tail dropped by bounds.
    br_b, thw_b = _pick_block(R, HW, itemsize, n_arrays=3, budget=budget)
    out = pl.pallas_call(
        _blend_kernel,
        out_shape=jax.ShapeDtypeStruct((R, HW), x1.dtype),
        grid=(pl.cdiv(R, br_b), pl.cdiv(HW, thw_b)),
        in_specs=[pl.BlockSpec((br_b, 1), lambda r, t: (r, 0)),
                  pl.BlockSpec((br_b, thw_b), lambda r, t: (r, t)),
                  pl.BlockSpec((br_b, thw_b), lambda r, t: (r, t))],
        out_specs=pl.BlockSpec((br_b, thw_b), lambda r, t: (r, t)),
        compiler_params=pltpu.CompilerParams(
            dimension_semantics=("parallel", "parallel"),
            vmem_limit_bytes=vmem_limit),
    )(gate.reshape(R, 1), x1r, x2r)

    return out.reshape(N, C, H, W)


def init_params(key, dim):
    """Deterministic, PyTorch-like uniform init; BN gamma=1, beta=0."""
    k1, k2, k3, k4 = jax.random.split(key, 4)
    half = dim // 2
    bound1 = 1.0 / (dim ** 0.5)
    bound2 = 1.0 / (half ** 0.5)
    return {
        "fc1_w": jax.random.uniform(k1, (half, dim), jnp.float32, -bound1, bound1),
        "fc1_b": jax.random.uniform(k2, (half,), jnp.float32, -bound1, bound1),
        "fc2_w": jax.random.uniform(k3, (dim, half), jnp.float32, -bound2, bound2),
        "fc2_b": jax.random.uniform(k4, (dim,), jnp.float32, -bound2, bound2),
        "bn_gamma": jnp.ones((half,), jnp.float32),
        "bn_beta": jnp.zeros((half,), jnp.float32),
    }


def _reference(x1, x2, params):
    """Pure-JAX replica of the PyTorch CS forward (training-mode BN)."""
    N, C, H, W = x1.shape
    x = x1 + x2
    sc = jnp.mean(x.reshape(N, C, H * W), axis=-1)
    zc = sc @ params["fc1_w"].T + params["fc1_b"]
    mu = jnp.mean(zc, axis=0, keepdims=True)
    var = jnp.mean((zc - mu) ** 2, axis=0, keepdims=True)
    zc = (zc - mu) / jnp.sqrt(var + 1e-5)
    zc = zc * params["bn_gamma"] + params["bn_beta"]
    zc = jnp.maximum(zc, 0.0)
    z = zc @ params["fc2_w"].T + params["fc2_b"]
    g = jax.nn.sigmoid(z)[:, :, None, None]
    return g * x1 + (1.0 - g) * x2


if __name__ == "__main__":
    key = jax.random.PRNGKey(0)
    kx1, kx2, kp = jax.random.split(key, 3)

    # Small shape -> fused single-kernel path.
    N, C, H, W = 2, 16, 16, 16
    x1 = jax.random.normal(kx1, (N, C, H, W), jnp.float32)
    x2 = jax.random.normal(kx2, (N, C, H, W), jnp.float32)
    params = init_params(kp, C)

    out = cs_forward(x1, x2, params)
    jax.block_until_ready(out)
    assert out.shape == (N, C, H, W)
    ref = _reference(x1, x2, params)
    assert jnp.max(jnp.abs(out - ref)) < 1e-3, "fused-path mismatch vs reference"

    # Also exercise the streaming (3-pass) path, including the ragged HW tail
    # (48*48 = 2304 is not a multiple of the 2048-lane tile).
    N2, C2, H2, W2 = 2, 16, 48, 48
    y1 = jax.random.normal(kx1, (N2, C2, H2, W2), jnp.float32)
    y2 = jax.random.normal(kx2, (N2, C2, H2, W2), jnp.float32)
    params2 = init_params(kp, C2)
    out2 = cs_forward(y1, y2, params2, force_multipass=True)
    jax.block_until_ready(out2)
    ref2 = _reference(y1, y2, params2)
    assert jnp.max(jnp.abs(out2 - ref2)) < 1e-3, "streaming-path mismatch vs reference"

    print("KERNEL_OK")
</pallas_src>

<mosaic_0001>
module attributes {stable_mosaic.version = 11 : i64} {
  func.func @_fused_kernel(%arg0: memref<2x16x256xf32, #tpu.memory_space<vmem>>, %arg1: memref<2x16x256xf32, #tpu.memory_space<vmem>>, %arg2: memref<16x8xf32, #tpu.memory_space<vmem>>, %arg3: memref<1x8xf32, #tpu.memory_space<vmem>>, %arg4: memref<1x8xf32, #tpu.memory_space<vmem>>, %arg5: memref<1x8xf32, #tpu.memory_space<vmem>>, %arg6: memref<8x16xf32, #tpu.memory_space<vmem>>, %arg7: memref<1x16xf32, #tpu.memory_space<vmem>>, %arg8: memref<2x16x256xf32, #tpu.memory_space<vmem>>) attributes {dimension_semantics = [], scalar_prefetch = 0 : i64, scratch_operands = 0 : i64, tpu.core_type = #tpu.core_type<tc>} {
    %c0 = arith.constant 0 : index
    %c0_0 = arith.constant 0 : index
    %c0_1 = arith.constant 0 : index
    %0 = vector.load %arg0[%c0, %c0_0, %c0_1] : memref<2x16x256xf32, #tpu.memory_space<vmem>>, vector<2x16x256xf32>
    %c0_2 = arith.constant 0 : index
    %c0_3 = arith.constant 0 : index
    %c0_4 = arith.constant 0 : index
    %1 = vector.load %arg1[%c0_2, %c0_3, %c0_4] : memref<2x16x256xf32, #tpu.memory_space<vmem>>, vector<2x16x256xf32>
    %2 = arith.addf %0, %1 : vector<2x16x256xf32>
    %cst = arith.constant dense<0.000000e+00> : vector<2x16xf32>
    %3 = vector.multi_reduction <add>, %2, %cst [2] : vector<2x16x256xf32> to vector<2x16xf32>
    %cst_5 = arith.constant 3.906250e-03 : f32
    %4 = vector.broadcast %cst_5 : f32 to vector<2x16xf32>
    %5 = arith.mulf %3, %4 : vector<2x16xf32>
    %c0_6 = arith.constant 0 : index
    %c0_7 = arith.constant 0 : index
    %6 = vector.load %arg2[%c0_6, %c0_7] : memref<16x8xf32, #tpu.memory_space<vmem>>, vector<16x8xf32>
    %c0_8 = arith.constant 0 : index
    %c0_9 = arith.constant 0 : index
    %7 = vector.load %arg3[%c0_8, %c0_9] : memref<1x8xf32, #tpu.memory_space<vmem>>, vector<1x8xf32>
    %c0_10 = arith.constant 0 : index
    %c0_11 = arith.constant 0 : index
    %8 = vector.load %arg4[%c0_10, %c0_11] : memref<1x8xf32, #tpu.memory_space<vmem>>, vector<1x8xf32>
    %c0_12 = arith.constant 0 : index
    %c0_13 = arith.constant 0 : index
    %9 = vector.load %arg5[%c0_12, %c0_13] : memref<1x8xf32, #tpu.memory_space<vmem>>, vector<1x8xf32>
    %c0_14 = arith.constant 0 : index
    %c0_15 = arith.constant 0 : index
    %10 = vector.load %arg6[%c0_14, %c0_15] : memref<8x16xf32, #tpu.memory_space<vmem>>, vector<8x16xf32>
    %c0_16 = arith.constant 0 : index
    %c0_17 = arith.constant 0 : index
    %11 = vector.load %arg7[%c0_16, %c0_17] : memref<1x16xf32, #tpu.memory_space<vmem>>, vector<1x16xf32>
    %cst_18 = arith.constant dense<0.000000e+00> : vector<2x8xf32>
    %12 = tpu.matmul %5, %6, %cst_18 {dimension_numbers = #tpu.dot_dimension_numbers<[1], [0], [0], [1], [0, 0, 1, 1], [], []>} : vector<2x16xf32>, vector<16x8xf32>, vector<2x8xf32> -> vector<2x8xf32>
    %13 = vector.broadcast %7 : vector<1x8xf32> to vector<2x8xf32>
    %14 = arith.addf %12, %13 : vector<2x8xf32>
    %cst_19 = arith.constant dense<0.000000e+00> : vector<8xf32>
    %15 = vector.multi_reduction <add>, %14, %cst_19 [0] : vector<2x8xf32> to vector<8xf32>
    %16 = vector.shape_cast %15 : vector<8xf32> to vector<1x8xf32>
    %cst_20 = arith.constant 2.000000e+00 : f32
    %17 = vector.broadcast %cst_20 : f32 to vector<1x8xf32>
    %18 = arith.divf %16, %17 : vector<1x8xf32>
    %19 = vector.broadcast %18 : vector<1x8xf32> to vector<2x8xf32>
    %20 = arith.subf %14, %19 : vector<2x8xf32>
    %21 = vector.broadcast %18 : vector<1x8xf32> to vector<2x8xf32>
    %22 = arith.subf %14, %21 : vector<2x8xf32>
    %23 = arith.mulf %20, %22 : vector<2x8xf32>
    %cst_21 = arith.constant dense<0.000000e+00> : vector<8xf32>
    %24 = vector.multi_reduction <add>, %23, %cst_21 [0] : vector<2x8xf32> to vector<8xf32>
    %25 = vector.shape_cast %24 : vector<8xf32> to vector<1x8xf32>
    %cst_22 = arith.constant 2.000000e+00 : f32
    %26 = vector.broadcast %cst_22 : f32 to vector<1x8xf32>
    %27 = arith.divf %25, %26 : vector<1x8xf32>
    %28 = vector.broadcast %18 : vector<1x8xf32> to vector<2x8xf32>
    %29 = arith.subf %14, %28 : vector<2x8xf32>
    %cst_23 = arith.constant 9.99999974E-6 : f32
    %30 = vector.broadcast %cst_23 : f32 to vector<1x8xf32>
    %31 = arith.addf %27, %30 : vector<1x8xf32>
    %32 = math.rsqrt %31 : vector<1x8xf32>
    %33 = vector.broadcast %32 : vector<1x8xf32> to vector<2x8xf32>
    %34 = arith.mulf %29, %33 : vector<2x8xf32>
    %35 = vector.broadcast %8 : vector<1x8xf32> to vector<2x8xf32>
    %36 = arith.mulf %34, %35 : vector<2x8xf32>
    %37 = vector.broadcast %9 : vector<1x8xf32> to vector<2x8xf32>
    %38 = arith.addf %36, %37 : vector<2x8xf32>
    %cst_24 = arith.constant 0.000000e+00 : f32
    %39 = vector.broadcast %cst_24 : f32 to vector<2x8xf32>
    %40 = arith.maximumf %38, %39 : vector<2x8xf32>
    %cst_25 = arith.constant dense<0.000000e+00> : vector<2x16xf32>
    %41 = tpu.matmul %40, %10, %cst_25 {dimension_numbers = #tpu.dot_dimension_numbers<[1], [0], [0], [1], [0, 0, 1, 1], [], []>} : vector<2x8xf32>, vector<8x16xf32>, vector<2x16xf32> -> vector<2x16xf32>
    %42 = vector.broadcast %11 : vector<1x16xf32> to vector<2x16xf32>
    %43 = arith.addf %41, %42 : vector<2x16xf32>
    %44 = arith.negf %43 : vector<2x16xf32>
    %45 = math.exp %44 : vector<2x16xf32>
    %cst_26 = arith.constant 1.000000e+00 : f32
    %46 = vector.broadcast %cst_26 : f32 to vector<2x16xf32>
    %47 = arith.addf %46, %45 : vector<2x16xf32>
    %48 = arith.divf %46, %47 : vector<2x16xf32>
    %49 = vector.shape_cast %48 : vector<2x16xf32> to vector<2x16x1xf32>
    %50 = arith.subf %0, %1 : vector<2x16x256xf32>
    %51 = vector.broadcast %49 : vector<2x16x1xf32> to vector<2x16x256xf32>
    %52 = arith.mulf %51, %50 : vector<2x16x256xf32>
    %53 = arith.addf %1, %52 : vector<2x16x256xf32>
    %c0_27 = arith.constant 0 : index
    %c0_28 = arith.constant 0 : index
    %c0_29 = arith.constant 0 : index
    %54 = vector.load %arg8[%c0_27, %c0_28, %c0_29] : memref<2x16x256xf32, #tpu.memory_space<vmem>>, vector<2x16x256xf32>
    tpu.vector_store %arg8[%c0_27, %c0_28, %c0_29], %53 {strides = array<i32>} : memref<2x16x256xf32, #tpu.memory_space<vmem>>, vector<2x16x256xf32>,
    return
  }
}

</mosaic_0001>

<llo_original>
// kernel: tpu_custom_call.1
$region0: #{tpu_custom_call.1}
  #allocation0 [shape = 'u32[]', space=smem, size = 0x4, offset = 0x4, fixed_abs, tag = 'smem constant byte address 0x4 - core index']
  #allocation1 [shape = 'u32[144,128]{1,0:T(1,128)}', space=vmem, size = 0x12000, scoped, tag = 'internal scratch']
  %s0 = inlined_call_operand.hbm [shape: f32[2,16,256], index: 0, kind: input, shape index: {}]
  %s1 = inlined_call_operand.hbm [shape: f32[2,16,256], index: 1, kind: input, shape index: {}]
  %s2 = inlined_call_operand.vmem [shape: f32[16,8], index: 2, kind: input, shape index: {}]
  %s3 = inlined_call_operand.vmem [shape: f32[1,8], index: 3, kind: input, shape index: {}]
  %s4 = inlined_call_operand.vmem [shape: f32[1,8], index: 4, kind: input, shape index: {}]
  %s5 = inlined_call_operand.vmem [shape: f32[1,8], index: 5, kind: input, shape index: {}]
  %s6 = inlined_call_operand.vmem [shape: f32[8,16], index: 6, kind: input, shape index: {}]
  %s7 = inlined_call_operand.vmem [shape: f32[1,16], index: 7, kind: input, shape index: {}]
  %s8 = inlined_call_operand.hbm [shape: f32[2,16,256], index: 8, kind: output, shape index: {}]
  %s9 = sld [smem:[#allocation0]]
  $region50: #{tpu_custom_call.1} parent=0
    _
  %s11 = ssub.s32 1, %s9
  %s12 = scalar_select 0, %s11, %s9
  $region1: #{tpu_custom_call.1} parent=0
    #allocation2 [shape = 'u8[32768]{0}', space=vmem, size = 0x8000, scoped, tag = 'input window, operand 0, single buffered']
    #allocation3 [shape = 's32[1]{0}', space=sflag, size = 0x4, scoped, tag = 'scoped memory for tpu_custom_call.1']
    #allocation4 [shape = 's32[1]{0}', space=sflag, size = 0x4, scoped, tag = 'scoped memory for tpu_custom_call.1']
    #allocation5 [shape = 'u8[32768]{0}', space=vmem, size = 0x8000, scoped, tag = 'input window, operand 1, single buffered']
    #allocation6 [shape = 's32[1]{0}', space=sflag, size = 0x4, scoped, tag = 'scoped memory for tpu_custom_call.1']
    #allocation7 [shape = 'u8[32768]{0}', space=vmem, size = 0x8000, scoped, tag = 'output window, operand 0, single buffered']
    %13 = vsyncpa [#allocation3], 0
    %14 = vsyncpa [#allocation6], 0
    %15 = vsyncpa [#allocation4], 0
    // Predicated region
    $region2: #{tpu_custom_call.1} parent=1 // pred_check
      _
    $region3: #{tpu_custom_call.1} parent=1 // pred_check_branch
      %17 = sbr.rel (0) target = $region5
    $region4: #{tpu_custom_call.1} parent=1 // pred_region
      %s19 = ssub.s32 1024, 1024
      %20 = vsyncadd [#allocation3], %s19
      %s21 = sshll.u32 [#allocation2], 4
      %s22 = int_to_ptr.vmem [resolvable:$true] %s21
      %27 = dma.hbm_to_vmem [thread:$0]  %s0, 1024, %s22, [#allocation3], 256, 256, 16
    $region5: #{tpu_custom_call.1} parent=1 // pred_fallthru
      _
    // Predicated region
    $region6: #{tpu_custom_call.1} parent=1 // pred_check
      _
    $region7: #{tpu_custom_call.1} parent=1 // pred_check_branch
      %29 = sbr.rel (0) target = $region9
    $region8: #{tpu_custom_call.1} parent=1 // pred_region
      %s31 = ssub.s32 1024, 1024
      %32 = vsyncadd [#allocation6], %s31
      %s33 = sshll.u32 [#allocation5], 4
      %s34 = int_to_ptr.vmem [resolvable:$true] %s33
      %39 = dma.hbm_to_vmem [thread:$0]  %s1, 1024, %s34, [#allocation6], 256, 256, 16
    $region9: #{tpu_custom_call.1} parent=1 // pred_fallthru
      _
    // Predicated region
    $region10: #{tpu_custom_call.1} parent=1 // pred_check
      _
    $region11: #{tpu_custom_call.1} parent=1 // pred_check_branch
      %41 = sbr.rel (0) target = $region13
    $region12: #{tpu_custom_call.1} parent=1 // pred_region
      _
    $region13: #{tpu_custom_call.1} parent=1 // pred_fallthru
      _
    // Predicated region
    $region14: #{tpu_custom_call.1} parent=1 // pred_check
      _
    $region15: #{tpu_custom_call.1} parent=1 // pred_check_branch
      %43 = sbr.rel (0) target = $region17
    $region16: #{tpu_custom_call.1} parent=1 // pred_region
      _
    $region17: #{tpu_custom_call.1} parent=1 // pred_fallthru
      _
    // Predicated region
    $region18: #{tpu_custom_call.1} parent=1 // pred_check
      _
    $region19: #{tpu_custom_call.1} parent=1 // pred_check_branch
      %45 = sbr.rel (0) target = $region21
    $region20: #{tpu_custom_call.1} parent=1 // pred_region
      _
    $region21: #{tpu_custom_call.1} parent=1 // pred_fallthru
      _
    // Predicated region
    $region22: #{tpu_custom_call.1} parent=1 // pred_check
      _
    $region23: #{tpu_custom_call.1} parent=1 // pred_check_branch
      %47 = sbr.rel (0) target = $region25
    $region24: #{tpu_custom_call.1} parent=1 // pred_region
      _
    $region25: #{tpu_custom_call.1} parent=1 // pred_fallthru
      _
    // Predicated region
    $region26: #{tpu_custom_call.1} parent=1 // pred_check
      _
    $region27: #{tpu_custom_call.1} parent=1 // pred_check_branch
      %49 = sbr.rel (0) target = $region29
    $region28: #{tpu_custom_call.1} parent=1 // pred_region
      _
    $region29: #{tpu_custom_call.1} parent=1 // pred_fallthru
      _
    // Predicated region
    $region30: #{tpu_custom_call.1} parent=1 // pred_check
      _
    $region31: #{tpu_custom_call.1} parent=1 // pred_check_branch
      %51 = sbr.rel (0) target = $region33
    $region32: #{tpu_custom_call.1} parent=1 // pred_region
      _
    $region33: #{tpu_custom_call.1} parent=1 // pred_fallthru
      _
    // Predicated region
    $region34: #{tpu_custom_call.1} parent=1 // pred_check
      _
    $region35: #{tpu_custom_call.1} parent=1 // pred_check_branch
      %53 = sbr.rel (0) target = $region37
    $region36: #{tpu_custom_call.1} parent=1 // pred_region
      %54 = dma.done [#allocation3], 1024
    $region37: #{tpu_custom_call.1} parent=1 // pred_fallthru
      _
    // Predicated region
    $region38: #{tpu_custom_call.1} parent=1 // pred_check
      _
    $region39: #{tpu_custom_call.1} parent=1 // pred_check_branch
      %56 = sbr.rel (0) target = $region41
    $region40: #{tpu_custom_call.1} parent=1 // pred_region
      %57 = dma.done [#allocation6], 1024
    $region41: #{tpu_custom_call.1} parent=1 // pred_fallthru
      _
    %v58 = vld [vmem:[#allocation2] sm:$0xff]
    %v59 = vld [vmem:[#allocation2 + $0x8] sm:$0xff]
    %v60 = vld [vmem:[#allocation2 + $0x10] sm:$0xff]
    %v61 = vld [vmem:[#allocation2 + $0x18] sm:$0xff]
    %v62 = vld [vmem:[#allocation2 + $0x20] sm:$0xff]
    %v63 = vld [vmem:[#allocation2 + $0x28] sm:$0xff]
    %v64 = vld [vmem:[#allocation2 + $0x30] sm:$0xff]
    %v65 = vld [vmem:[#allocation2 + $0x38] sm:$0xff]
    %v66 = vld [vmem:[#allocation5] sm:$0xff]
    %v67 = vld [vmem:[#allocation5 + $0x8] sm:$0xff]
    %v68 = vld [vmem:[#allocation5 + $0x10] sm:$0xff]
    %v69 = vld [vmem:[#allocation5 + $0x18] sm:$0xff]
    %v70 = vld [vmem:[#allocation5 + $0x20] sm:$0xff]
    %v71 = vld [vmem:[#allocation5 + $0x28] sm:$0xff]
    %v72 = vld [vmem:[#allocation5 + $0x30] sm:$0xff]
    %v73 = vld [vmem:[#allocation5 + $0x38] sm:$0xff]
    %v74 = vadd.f32 %v58, %v66
    %v75 = vadd.f32 %v59, %v67
    %v76 = vadd.f32 %v60, %v68
    %v77 = vadd.f32 %v61, %v69
    %v78 = vadd.f32 %v62, %v70
    %v79 = vadd.f32 %v63, %v71
    %v80 = vadd.f32 %v64, %v72
    %v81 = vadd.f32 %v65, %v73
    %v82 = vadd.f32 %v74, %v75
    %83 = vadd.xlane.f32.xlu0 %v82
    %v84 = vpop.xlane.xlu0 %83
    %v85 = vadd.f32 %v76, %v77
    %86 = vadd.xlane.f32.xlu0 %v85
    %v87 = vpop.xlane.xlu0 %86
    %v88 = vadd.f32 %v78, %v79
    %89 = vadd.xlane.f32.xlu0 %v88
    %v90 = vpop.xlane.xlu0 %89
    %v91 = vadd.f32 %v80, %v81
    %92 = vadd.xlane.f32.xlu0 %v91
    %v93 = vpop.xlane.xlu0 %92
    %v94 = vmul.f32 %v84, 0.00390625
    %v95 = vmul.f32 %v87, 0.00390625
    %v96 = vmul.f32 %v90, 0.00390625
    %v97 = vmul.f32 %v93, 0.00390625
    %v98 = vld [vmem:[%s2] sm:$0xff]
    %v99 = vld [vmem:[%s2 + $0x8] sm:$0xff]
    %v100 = vld [vmem:[%s3] sm:$0x1]
    %v101 = vld [vmem:[%s4] sm:$0x1]
    %v102 = vld [vmem:[%s5] sm:$0x1]
    %v103 = vld [vmem:[%s6] sm:$0xff]
    %v104 = vld [vmem:[%s7] sm:$0x1]
    %v106 = vlaneseq
    %v107 = vshrl.u32 %v106, 7
    %v108 = vsub.s32 0, %v107
    %v109 = vrot.slane %v100, %v108
    %v115 = vlaneseq
    %v116 = vand.u32 %v115, 127
    %v117 = vlaneseq
    %v118 = vshrl.u32 %v117, 7
    %v119 = vsub.s32 %v116, %v118
    %v120 = vrot.slane %v94, %v119
    %v121 = vadd.s32 %v116, 4294967288
    %v122 = vlaneseq
    %v123 = vshrl.u32 %v122, 7
    %v124 = vsub.s32 %v121, %v123
    %v125 = vrot.slane %v95, %v124
    %vm126 = vcmask 130112
    %v127 = vsel %vm126, %v125, %v120
    %v128 = vlaneseq
    %v129 = vshrl.u32 %v128, 7
    %v130 = vsub.s32 %v116, %v129
    %v131 = vrot.slane %v96, %v130
    %v132 = vlaneseq
    %v133 = vshrl.u32 %v132, 7
    %v134 = vsub.s32 %v121, %v133
    %v135 = vrot.slane %v97, %v134
    %v136 = vsel %vm126, %v135, %v131
    %vm137 = vcmask 1041409
    %v138 = vsel %vm137, %v136, %v127
    %vm139 = vcmask 130048
    %v140 = vsel %vm139, %v138, 0
    %142 = vmatprep.subr.mxu0 0.0
    %143 = vmatpush1.msra.mxu0 0.0
    %144 = vmatprep.subr.mxu0 0.0
    %145 = vmatpush1.msra.mxu0 0.0
    %146 = vmatprep.subr.mxu0 0.0
    %147 = vmatpush1.msra.mxu0 0.0
    %148 = vmatprep.subr.mxu0 0.0
    %149 = vmatpush1.msra.mxu0 0.0
    %150 = vmatprep.subr.mxu0 0.0
    %151 = vmatpush1.msra.mxu0 0.0
    %152 = vmatprep.subr.mxu0 0.0
    %153 = vmatpush1.msra.mxu0 0.0
    %154 = vmatprep.subr.mxu0 0.0
    %155 = vmatpush1.msra.mxu0 0.0
    %156 = vmatprep.subr.mxu0 0.0
    %157 = vmatpush1.msra.mxu0 0.0
    %158 = vmatprep.subr.mxu0 0.0
    %159 = vmatpush1.msra.mxu0 0.0
    %160 = vmatprep.subr.mxu0 0.0
    %161 = vmatpush1.msra.mxu0 0.0
    %162 = vmatprep.subr.mxu0 0.0
    %163 = vmatpush1.msra.mxu0 0.0
    %164 = vmatprep.subr.mxu0 0.0
    %165 = vmatpush1.msra.mxu0 0.0
    %166 = vmatprep.subr.mxu0 0.0
    %167 = vmatpush1.msra.mxu0 0.0
    %168 = vmatprep.subr.mxu0 0.0
    %169 = vmatpush1.msra.mxu0 0.0
    %170 = vmatprep.subr.mxu0 0.0
    %171 = vmatpush1.msra.mxu0 %v99
    %172 = vmatprep.subr.mxu0 0.0
    %173 = vmatpush1.msra.mxu0 %v98
    %174 = vmatprep.subr.mxu0 0.0
    %175 = vmatpush2.msra.mxu0 0.0
    %176 = vmatprep.subr.mxu0 0.0
    %177 = vmatpush2.msra.mxu0 0.0
    %178 = vmatprep.subr.mxu0 0.0
    %179 = vmatpush2.msra.mxu0 0.0
    %180 = vmatprep.subr.mxu0 0.0
    %181 = vmatpush2.msra.mxu0 0.0
    %182 = vmatprep.subr.mxu0 0.0
    %183 = vmatpush2.msra.mxu0 0.0
    %184 = vmatprep.subr.mxu0 0.0
    %185 = vmatpush2.msra.mxu0 0.0
    %186 = vmatprep.subr.mxu0 0.0
    %187 = vmatpush2.msra.mxu0 0.0
    %188 = vmatprep.subr.mxu0 0.0
    %189 = vmatpush2.msra.mxu0 0.0
    %190 = vmatprep.subr.mxu0 0.0
    %191 = vmatpush2.msra.mxu0 0.0
    %192 = vmatprep.subr.mxu0 0.0
    %193 = vmatpush2.msra.mxu0 0.0
    %194 = vmatprep.subr.mxu0 0.0
    %195 = vmatpush2.msra.mxu0 0.0
    %196 = vmatprep.subr.mxu0 0.0
    %197 = vmatpush2.msra.mxu0 0.0
    %198 = vmatprep.subr.mxu0 0.0
    %199 = vmatpush2.msra.mxu0 0.0
    %200 = vmatprep.subr.mxu0 0.0
    %201 = vmatpush2.msra.mxu0 0.0
    %202 = vmatprep.subr.mxu0 0.0
    %203 = vmatpush2.msra.mxu0 0.0
    %204 = vmatprep.subr.mxu0 0.0
    %205 = vmatpush2.msra.mxu0 0.0
    %206 = vmatprep.mubr.f32.mxu0 0.0
    %207 = vmatmul.mubr.f32.gmra.mxu0 %v140
    %v208 = vpop.f32.mrf.mxu0
    %v209 = vadd.f32 %v109, %v208
    %v210 = vpop.f32.mrf.mxu0
    %211 = vdwg.mxu0
    %vm212 = vcmask 58368
    %v213 = vsel %vm212, %v209, 0.0
    %v214 = vrot.slane %v213, 4
    %v215 = vadd.f32 %v213, %v214
    %v216 = vrot.slane %v215, 2
    %v217 = vadd.f32 %v215, %v216
    %v218 = vrot.slane %v217, 1
    %v219 = vadd.f32 %v217, %v218
    %v220 = vrcp.pop 2.0
    %v221 = vmul.f32 %v219, %v220
    %v222 = vsub.f32 %v209, %v221
    %v223 = vmul.f32 %v222, %v222
    %v224 = vsel %vm212, %v223, 0.0
    %v225 = vrot.slane %v224, 4
    %v226 = vadd.f32 %v224, %v225
    %v227 = vrot.slane %v226, 2
    %v228 = vadd.f32 %v226, %v227
    %v229 = vrot.slane %v228, 1
    %v230 = vadd.f32 %v228, %v229
    %v231 = vmul.f32 %v230, %v220
    %v232 = vadd.f32 %v231, 1e-05
    %v233 = vrsqrt.pop %v232
    %v234 = vmul.f32 %v222, %v233
    %v236 = vlaneseq
    %v237 = vshrl.u32 %v236, 7
    %v238 = vsub.s32 0, %v237
    %v239 = vrot.slane %v101, %v238
    %v241 = vmul.f32 %v234, %v239
    %v243 = vlaneseq
    %v244 = vshrl.u32 %v243, 7
    %v245 = vsub.s32 0, %v244
    %v246 = vrot.slane %v102, %v245
    %v248 = vadd.f32 %v241, %v246
    %v249 = vmax.f32 %v248, 0.0
    %v251 = vlaneseq
    %v252 = vshrl.u32 %v251, 7
    %v253 = vsub.s32 0, %v252
    %v254 = vrot.slane %v104, %v253
    %vm256 = vcmask 64512
    %v258 = vsel %vm256, %v249, 0
    %260 = vmatprep.subr.mxu0 0.0
    %261 = vmatpush1.msra.mxu0 0.0
    %262 = vmatprep.subr.mxu0 0.0
    %263 = vmatpush1.msra.mxu0 0.0
    %264 = vmatprep.subr.mxu0 0.0
    %265 = vmatpush1.msra.mxu0 0.0
    %266 = vmatprep.subr.mxu0 0.0
    %267 = vmatpush1.msra.mxu0 0.0
    %268 = vmatprep.subr.mxu0 0.0
    %269 = vmatpush1.msra.mxu0 0.0
    %270 = vmatprep.subr.mxu0 0.0
    %271 = vmatpush1.msra.mxu0 0.0
    %272 = vmatprep.subr.mxu0 0.0
    %273 = vmatpush1.msra.mxu0 0.0
    %274 = vmatprep.subr.mxu0 0.0
    %275 = vmatpush1.msra.mxu0 0.0
    %276 = vmatprep.subr.mxu0 0.0
    %277 = vmatpush1.msra.mxu0 0.0
    %278 = vmatprep.subr.mxu0 0.0
    %279 = vmatpush1.msra.mxu0 0.0
    %280 = vmatprep.subr.mxu0 0.0
    %281 = vmatpush1.msra.mxu0 0.0
    %282 = vmatprep.subr.mxu0 0.0
    %283 = vmatpush1.msra.mxu0 0.0
    %284 = vmatprep.subr.mxu0 0.0
    %285 = vmatpush1.msra.mxu0 0.0
    %286 = vmatprep.subr.mxu0 0.0
    %287 = vmatpush1.msra.mxu0 0.0
    %288 = vmatprep.subr.mxu0 0.0
    %289 = vmatpush1.msra.mxu0 0.0
    %290 = vmatprep.subr.mxu0 0.0
    %291 = vmatpush1.msra.mxu0 %v103
    %292 = vmatprep.subr.mxu0 0.0
    %293 = vmatpush2.msra.mxu0 0.0
    %294 = vmatprep.subr.mxu0 0.0
    %295 = vmatpush2.msra.mxu0 0.0
    %296 = vmatprep.subr.mxu0 0.0
    %297 = vmatpush2.msra.mxu0 0.0
    %298 = vmatprep.subr.mxu0 0.0
    %299 = vmatpush2.msra.mxu0 0.0
    %300 = vmatprep.subr.mxu0 0.0
    %301 = vmatpush2.msra.mxu0 0.0
    %302 = vmatprep.subr.mxu0 0.0
    %303 = vmatpush2.msra.mxu0 0.0
    %304 = vmatprep.subr.mxu0 0.0
    %305 = vmatpush2.msra.mxu0 0.0
    %306 = vmatprep.subr.mxu0 0.0
    %307 = vmatpush2.msra.mxu0 0.0
    %308 = vmatprep.subr.mxu0 0.0
    %309 = vmatpush2.msra.mxu0 0.0
    %310 = vmatprep.subr.mxu0 0.0
    %311 = vmatpush2.msra.mxu0 0.0
    %312 = vmatprep.subr.mxu0 0.0
    %313 = vmatpush2.msra.mxu0 0.0
    %314 = vmatprep.subr.mxu0 0.0
    %315 = vmatpush2.msra.mxu0 0.0
    %316 = vmatprep.subr.mxu0 0.0
    %317 = vmatpush2.msra.mxu0 0.0
    %318 = vmatprep.subr.mxu0 0.0
    %319 = vmatpush2.msra.mxu0 0.0
    %320 = vmatprep.subr.mxu0 0.0
    %321 = vmatpush2.msra.mxu0 0.0
    %322 = vmatprep.subr.mxu0 0.0
    %323 = vmatpush2.msra.mxu0 0.0
    %324 = vmatprep.mubr.f32.mxu0 0.0
    %325 = vmatmul.mubr.f32.gmra.mxu0 %v258
    %v326 = vpop.f32.mrf.mxu0
    %v327 = vadd.f32 %v254, %v326
    %v328 = vpop.f32.mrf.mxu0
    %329 = vdwg.mxu0
    %v330 = vxor.u32 %v327, 2147483648
    %v331 = vmul.f32 %v330, 1.442695
    %v332 = vpow.pop %v331
    %v333 = vadd.f32 %v332, 1.0
    %v334 = vrcp.pop %v333
    %v335 = vmul.f32 1.0, %v334
    %v336 = vlaneseq
    %v337 = vshrl.u32 %v336, 7
    %v338 = vsub.s32 0, %v337
    %v339 = vrot.slane %v335, %v338
    %341 = vbcast.lane.b32.xlu0 %v339, 256
    %v342 = vpop.permute.xlu0 %341
    %s344 = sor.u32 256, 8
    %345 = vbcast.lane.b32.xlu0 %v339, %s344
    %v346 = vpop.permute.xlu0 %345
    %v347 = vlaneseq
    %v348 = vshrl.u32 %v347, 7
    %v349 = vsub.s32 1, %v348
    %v350 = vrot.slane %v335, %v349
    %352 = vbcast.lane.b32.xlu0 %v350, 256
    %v353 = vpop.permute.xlu0 %352
    %s355 = sor.u32 256, 8
    %356 = vbcast.lane.b32.xlu0 %v350, %s355
    %v357 = vpop.permute.xlu0 %356
    %v358 = vsub.f32 %v58, %v66
    %v359 = vsub.f32 %v59, %v67
    %v360 = vsub.f32 %v60, %v68
    %v361 = vsub.f32 %v61, %v69
    %v362 = vsub.f32 %v62, %v70
    %v363 = vsub.f32 %v63, %v71
    %v364 = vsub.f32 %v64, %v72
    %v365 = vsub.f32 %v65, %v73
    %v366 = vmul.f32 %v342, %v358
    %v367 = vmul.f32 %v342, %v359
    %v368 = vmul.f32 %v346, %v360
    %v369 = vmul.f32 %v346, %v361
    %v370 = vmul.f32 %v353, %v362
    %v371 = vmul.f32 %v353, %v363
    %v372 = vmul.f32 %v357, %v364
    %v373 = vmul.f32 %v357, %v365
    %v374 = vadd.f32 %v66, %v366
    %v375 = vadd.f32 %v67, %v367
    %v376 = vadd.f32 %v68, %v368
    %v377 = vadd.f32 %v69, %v369
    %v378 = vadd.f32 %v70, %v370
    %v379 = vadd.f32 %v71, %v371
    %v380 = vadd.f32 %v72, %v372
    %v381 = vadd.f32 %v73, %v373
    %382 = vst [vmem:[#allocation7] sm:$0xff] %v374
    %383 = vst [vmem:[#allocation7 + $0x8] sm:$0xff] %v375
    %384 = vst [vmem:[#allocation7 + $0x10] sm:$0xff] %v376
    %385 = vst [vmem:[#allocation7 + $0x18] sm:$0xff] %v377
    %386 = vst [vmem:[#allocation7 + $0x20] sm:$0xff] %v378
    %387 = vst [vmem:[#allocation7 + $0x28] sm:$0xff] %v379
    %388 = vst [vmem:[#allocation7 + $0x30] sm:$0xff] %v380
    %389 = vst [vmem:[#allocation7 + $0x38] sm:$0xff] %v381
    // Predicated region
    $region42: #{tpu_custom_call.1} parent=1 // pred_check
      _
    $region43: #{tpu_custom_call.1} parent=1 // pred_check_branch
      %391 = sbr.rel (0) target = $region45
    $region44: #{tpu_custom_call.1} parent=1 // pred_region
      %s393 = ssub.s32 1024, 1024
      %394 = vsyncadd [#allocation4], %s393
      %s395 = sshll.u32 [#allocation7], 4
      %s396 = int_to_ptr.vmem [resolvable:$true] %s395
      %401 = dma.vmem_to_hbm [thread:$0]  %s396, 1024, %s8, [#allocation4], 256, 256, 16
    $region45: #{tpu_custom_call.1} parent=1 // pred_fallthru
      _
    // Predicated region
    $region46: #{tpu_custom_call.1} parent=1 // pred_check
      _
    $region47: #{tpu_custom_call.1} parent=1 // pred_check_branch
      %403 = sbr.rel (0) target = $region49
    $region48: #{tpu_custom_call.1} parent=1 // pred_region
      %404 = dma.done [#allocation4], 1024
    $region49: #{tpu_custom_call.1} parent=1 // pred_fallthru
      _
    %405 = vsyncpa [#allocation3], 1
    %406 = vsyncpa [#allocation6], 1
    %407 = vsyncpa [#allocation4], 1

</llo_original>
